<compile_context>
chip_gen: v5e
topology: v5e:2x2
jax: 0.10.0
libtpu: 0.0.40
codegen_flags: <defaults>
</compile_context>

<pallas_src>
import functools

import jax
import jax.numpy as jnp
from jax.experimental import pallas as pl
from jax.experimental.pallas import tpu as pltpu

NEG_BIG = -1e30  # finite "minus infinity": exp() underflows to 0, no inf*0 NaNs


def _log_softmax_rows(x):
    m = jnp.max(x, axis=1, keepdims=True)
    z = x - m
    lse = jnp.log(jnp.sum(jnp.exp(z), axis=1, keepdims=True))
    return z - lse


def _distill_kernel(*refs, distill_type, int_labels, alpha, tau,
                    n_valid, c_valid):
    if distill_type == 'none':
        cls_ref, lab_ref, out_ref, acc_base, acc_dist = refs
        teach_ref = None
    else:
        cls_ref, lab_ref, teach_ref, out_ref, acc_base, acc_dist = refs

    pid = pl.program_id(0)
    last = pl.num_programs(0) - 1

    @pl.when(pid == 0)
    def _init():
        acc_base[...] = jnp.zeros_like(acc_base)
        acc_dist[...] = jnp.zeros_like(acc_dist)

    x = cls_ref[...].astype(jnp.float32)                      # (T, Cp)
    tile_rows, cp = x.shape

    # validity mask for rows added by N-padding
    row = (jax.lax.broadcasted_iota(jnp.int32, (tile_rows, 1), 0)
           + pid * tile_rows)
    valid = (row < n_valid).astype(jnp.float32)               # (T, 1)

    lsm = _log_softmax_rows(x)                                # (T, Cp)
    col = jax.lax.broadcasted_iota(jnp.int32, (tile_rows, cp), 1)

    if int_labels:
        lab_idx = lab_ref[...].astype(jnp.int32)              # (T, 1)
        w_base = (col == lab_idx).astype(jnp.float32)         # in-kernel one-hot
    else:
        w_base = lab_ref[...].astype(jnp.float32)             # soft labels

    if distill_type == 'hard':
        t = teach_ref[...].astype(jnp.float32)
        tmax = jnp.max(t, axis=1, keepdims=True)
        # torch.argmax semantics: first occurrence of the max
        t_idx = jnp.min(jnp.where(t == tmax, col, jnp.int32(cp)),
                        axis=1, keepdims=True)                # (T, 1)
        w_t = (col == t_idx).astype(jnp.float32)
        # fused weighted CE: (1-alpha)*base_CE + alpha*hard_CE, one lane reduce
        w = (1.0 - alpha) * w_base + alpha * w_t
        per_row = jnp.sum(w * lsm, axis=1, keepdims=True)     # (T, 1)
        acc_base[...] += jnp.sum(per_row * valid, axis=0, keepdims=True)

    elif distill_type == 'soft':
        per_row = jnp.sum(w_base * lsm, axis=1, keepdims=True)
        acc_base[...] += jnp.sum(per_row * valid, axis=0, keepdims=True)

        inv_t = 1.0 / tau
        zt = teach_ref[...].astype(jnp.float32) * inv_t
        zt = zt - jnp.max(zt, axis=1, keepdims=True)
        et = jnp.exp(zt)                                      # reused
        st = jnp.sum(et, axis=1, keepdims=True)
        lt = zt - jnp.log(st)                                 # teacher log-softmax
        pt = et / st                                          # teacher softmax
        ls = lsm if tau == 1.0 else _log_softmax_rows(x * inv_t)
        kl_row = jnp.sum(pt * (lt - ls), axis=1, keepdims=True)
        acc_dist[...] += jnp.sum(kl_row * valid, axis=0, keepdims=True)

    else:  # 'none'
        per_row = jnp.sum(w_base * lsm, axis=1, keepdims=True)
        acc_base[...] += jnp.sum(per_row * valid, axis=0, keepdims=True)

    @pl.when(pid == last)
    def _finalize():
        if distill_type == 'soft':
            base = acc_base[...] * (-(1.0 - alpha) / n_valid)
            dist = acc_dist[...] * (alpha * tau * tau / (n_valid * c_valid))
            out_ref[...] = base + dist
        else:
            # 'none' and fused 'hard' are both a single negated row-mean
            out_ref[...] = acc_base[...] * (-1.0 / n_valid)


def _choose_tile_n(n, c_pad, itemsize, num_big_inputs,
                   pipeline_budget_bytes=12 * 1024 * 1024):
    """Largest multiple of 8 whose double-buffered big inputs fit the budget."""
    per_row = max(num_big_inputs * 2 * c_pad * itemsize, 1)   # 2 = double buffer
    tile = pipeline_budget_bytes // per_row
    tile = max(8, (tile // 8) * 8)
    tile = min(tile, 1024)
    n_ceil8 = ((n + 7) // 8) * 8
    return min(tile, n_ceil8)


def _pad2(x, n_pad, c_pad, c_fill):
    n, c = x.shape
    if c_pad > c:
        x = jnp.pad(x, ((0, 0), (0, c_pad - c)), constant_values=c_fill)
    if n_pad > n:
        x = jnp.pad(x, ((0, n_pad - n), (0, 0)), constant_values=0)
    return x


def distillation_loss(cls_score, labels, teacher_outputs=None, *,
                      distill_type='hard', alpha=0.5, tau=1.0):
    """JAX/Pallas port of DistillationLoss.forward.

    Note: the PyTorch module's `loss_weight` __init__ arg is unused in forward.
    """
    assert distill_type in ('none', 'soft', 'hard')
    n, c = cls_score.shape
    int_labels = (labels.shape != cls_score.shape)
    need_teacher = distill_type != 'none'
    if need_teacher:
        assert teacher_outputs is not None and teacher_outputs.shape == (n, c)

    # lane-dense class dim: pad C to a multiple of 128
    c_pad = max(128, pl.cdiv(c, 128) * 128)
    itemsize = jnp.dtype(cls_score.dtype).itemsize
    num_big = 1 + (0 if int_labels else 1) + (1 if need_teacher else 0)
    tile_n = _choose_tile_n(n, c_pad, itemsize, num_big)
    n_pad = pl.cdiv(n, tile_n) * tile_n

    big_spec = pl.BlockSpec((tile_n, c_pad), lambda i: (i, 0))

    args = [_pad2(cls_score, n_pad, c_pad, NEG_BIG)]
    specs = [big_spec]

    if int_labels:
        lab_p = _pad2(labels.reshape(n, 1).astype(jnp.int32), n_pad, 1, 0)
        args.append(lab_p)
        specs.append(pl.BlockSpec((tile_n, 1), lambda i: (i, 0)))
    else:
        args.append(_pad2(labels, n_pad, c_pad, 0))
        specs.append(big_spec)

    if need_teacher:
        args.append(_pad2(teacher_outputs, n_pad, c_pad, NEG_BIG))
        specs.append(big_spec)

    kernel = functools.partial(
        _distill_kernel,
        distill_type=distill_type, int_labels=int_labels,
        alpha=float(alpha), tau=float(tau), n_valid=n, c_valid=c)

    out = pl.pallas_call(
        kernel,
        out_shape=jax.ShapeDtypeStruct((1, 1), jnp.float32),
        grid_spec=pltpu.PrefetchScalarGridSpec(
            num_scalar_prefetch=0,
            grid=(n_pad // tile_n,),
            in_specs=specs,
            out_specs=pl.BlockSpec((1, 1), lambda i: (0, 0)),
            scratch_shapes=[pltpu.VMEM((1, 1), jnp.float32),
                            pltpu.VMEM((1, 1), jnp.float32)]),
        compiler_params=pltpu.CompilerParams(
            dimension_semantics=("arbitrary",)),
    )(*args)
    # TODO(synk): on v7x, shard the row reduction across the 2 TensorCores
    # (leading parallel grid axis emitting a (2,1) partial output).
    return out[0, 0]


if __name__ == "__main__":
    key = jax.random.PRNGKey(0)
    k1, k2, k3, k4 = jax.random.split(key, 4)

    N, C = 8, 128  # small, vreg-aligned (sublane=8, lane=128)
    cls_score = jax.random.normal(k1, (N, C), dtype=jnp.float32)
    teacher_outputs = jax.random.normal(k2, (N, C), dtype=jnp.float32)
    labels_int = jax.random.randint(k3, (N,), 0, C, dtype=jnp.int32)
    labels_soft = jax.nn.softmax(jax.random.normal(k4, (N, C)), axis=1)

    # Default module config: distill_type='hard', alpha=0.5, tau=1.0,
    # integer-label base loss (F.cross_entropy branch).
    loss_hard = distillation_loss(cls_score, labels_int, teacher_outputs,
                                  distill_type='hard', alpha=0.5, tau=1.0)

    # Soft-label base-loss branch + 'soft' (KL) distillation.
    loss_soft = distillation_loss(cls_score, labels_soft, teacher_outputs,
                                  distill_type='soft', alpha=0.5, tau=2.0)

    # 'none' branch: base loss only; teacher is accepted but never DMA'd.
    loss_none = distillation_loss(cls_score, labels_int, teacher_outputs,
                                  distill_type='none')

    # bf16 inputs (halved HBM traffic) + ragged N/C exercising the padding
    # and in-kernel row masking paths.
    k5, k6, k7 = jax.random.split(k1, 3)
    N2, C2 = 10, 96
    cls_bf16 = jax.random.normal(k5, (N2, C2), jnp.float32).astype(jnp.bfloat16)
    teach_bf16 = jax.random.normal(k6, (N2, C2), jnp.float32).astype(jnp.bfloat16)
    labels2 = jax.random.randint(k7, (N2,), 0, C2, dtype=jnp.int32)
    loss_hard_bf16 = distillation_loss(cls_bf16, labels2, teach_bf16,
                                       distill_type='hard', alpha=0.5)

    jax.block_until_ready((loss_hard, loss_soft, loss_none, loss_hard_bf16))
    print("KERNEL_OK")
</pallas_src>

<mosaic_0001>
module attributes {stable_mosaic.version = 11 : i64} {
  func.func @_distill_kernel(%arg0: i32, %arg1: memref<8x128xf32, #tpu.memory_space<vmem>>, %arg2: memref<8x1xi32, #tpu.memory_space<vmem>>, %arg3: memref<8x128xf32, #tpu.memory_space<vmem>>, %arg4: memref<1x1xf32, #tpu.memory_space<vmem>>, %arg5: memref<1x1xf32, #tpu.memory_space<vmem>>, %arg6: memref<1x1xf32, #tpu.memory_space<vmem>>) attributes {dimension_semantics = [#tpu.dimension_semantics<arbitrary>], iteration_bounds = array<i64: 1>, scalar_prefetch = 0 : i64, scratch_operands = 2 : i64, tpu.core_type = #tpu.core_type<tc>, window_params = [{transform_indices = @transform_0, window_bounds = array<i64: 8, 128>}, {transform_indices = @transform_1, window_bounds = array<i64: 8, 1>}, {transform_indices = @transform_2, window_bounds = array<i64: 8, 128>}, {pipeline_mode = #tpu.pipeline_mode<synchronous>, transform_indices = @transform_3, window_bounds = array<i64: 1, 1>}]} {
    %c0_i32 = arith.constant 0 : i32
    %0 = arith.cmpi eq, %arg0, %c0_i32 : i32
    %1 = arith.extui %0 : i1 to i32
    %c0_i32_0 = arith.constant 0 : i32
    %2 = arith.cmpi ne, %1, %c0_i32_0 : i32
    scf.if %2 {
      %cst_20 = arith.constant 0.000000e+00 : f32
      %58 = vector.broadcast %cst_20 : f32 to vector<1x1xf32>
      %c0_21 = arith.constant 0 : index
      %c0_22 = arith.constant 0 : index
      %59 = vector.load %arg5[%c0_21, %c0_22] : memref<1x1xf32, #tpu.memory_space<vmem>>, vector<1x1xf32>
      tpu.vector_store %arg5[%c0_21, %c0_22], %58 {strides = array<i32>} : memref<1x1xf32, #tpu.memory_space<vmem>>, vector<1x1xf32>,
      %cst_23 = arith.constant 0.000000e+00 : f32
      %60 = vector.broadcast %cst_23 : f32 to vector<1x1xf32>
      %c0_24 = arith.constant 0 : index
      %c0_25 = arith.constant 0 : index
      %61 = vector.load %arg6[%c0_24, %c0_25] : memref<1x1xf32, #tpu.memory_space<vmem>>, vector<1x1xf32>
      tpu.vector_store %arg6[%c0_24, %c0_25], %60 {strides = array<i32>} : memref<1x1xf32, #tpu.memory_space<vmem>>, vector<1x1xf32>,
    } else {
    }
    %c0 = arith.constant 0 : index
    %c0_1 = arith.constant 0 : index
    %3 = vector.load %arg1[%c0, %c0_1] : memref<8x128xf32, #tpu.memory_space<vmem>>, vector<8x128xf32>
    %4 = tpu.iota {dimensions = array<i32: 0>} : vector<8x1xi32>
    %c8_i32 = arith.constant 8 : i32
    %5 = arith.muli %arg0, %c8_i32 : i32
    %6 = vector.broadcast %5 : i32 to vector<8x1xi32>
    %7 = arith.addi %4, %6 : vector<8x1xi32>
    %c8_i32_2 = arith.constant 8 : i32
    %8 = vector.broadcast %c8_i32_2 : i32 to vector<8x1xi32>
    %9 = arith.cmpi slt, %7, %8 : vector<8x1xi32>
    %10 = arith.extui %9 : vector<8x1xi1> to vector<8x1xi32>
    %11 = arith.sitofp %10 : vector<8x1xi32> to vector<8x1xf32>
    %cst = arith.constant dense<0xFF800000> : vector<8xf32>
    %12 = vector.multi_reduction <maximumf>, %3, %cst [1] : vector<8x128xf32> to vector<8xf32>
    %13 = vector.shape_cast %12 : vector<8xf32> to vector<8x1xf32>
    %14 = vector.broadcast %13 : vector<8x1xf32> to vector<8x128xf32>
    %15 = arith.subf %3, %14 : vector<8x128xf32>
    %16 = math.exp %15 : vector<8x128xf32>
    %cst_3 = arith.constant dense<0.000000e+00> : vector<8xf32>
    %17 = vector.multi_reduction <add>, %16, %cst_3 [1] : vector<8x128xf32> to vector<8xf32>
    %18 = vector.shape_cast %17 : vector<8xf32> to vector<8x1xf32>
    %19 = math.log %18 : vector<8x1xf32>
    %20 = vector.broadcast %19 : vector<8x1xf32> to vector<8x128xf32>
    %21 = arith.subf %15, %20 : vector<8x128xf32>
    %22 = tpu.iota {dimensions = array<i32: 1>} : vector<8x128xi32>
    %c0_4 = arith.constant 0 : index
    %c0_5 = arith.constant 0 : index
    %23 = vector.load %arg2[%c0_4, %c0_5] : memref<8x1xi32, #tpu.memory_space<vmem>>, vector<8x1xi32>
    %24 = vector.broadcast %23 : vector<8x1xi32> to vector<8x128xi32>
    %25 = arith.cmpi eq, %22, %24 : vector<8x128xi32>
    %26 = arith.extui %25 : vector<8x128xi1> to vector<8x128xi32>
    %27 = arith.sitofp %26 : vector<8x128xi32> to vector<8x128xf32>
    %c0_6 = arith.constant 0 : index
    %c0_7 = arith.constant 0 : index
    %28 = vector.load %arg3[%c0_6, %c0_7] : memref<8x128xf32, #tpu.memory_space<vmem>>, vector<8x128xf32>
    %cst_8 = arith.constant dense<0xFF800000> : vector<8xf32>
    %29 = vector.multi_reduction <maximumf>, %28, %cst_8 [1] : vector<8x128xf32> to vector<8xf32>
    %30 = vector.shape_cast %29 : vector<8xf32> to vector<8x1xf32>
    %31 = vector.broadcast %30 : vector<8x1xf32> to vector<8x128xf32>
    %32 = arith.cmpf oeq, %28, %31 : vector<8x128xf32>
    %c128_i32 = arith.constant 128 : i32
    %33 = vector.broadcast %c128_i32 : i32 to vector<8x128xi32>
    %34 = arith.select %32, %22, %33 : vector<8x128xi1>, vector<8x128xi32>
    %cst_9 = arith.constant dense<2147483647> : vector<8xi32>
    %35 = vector.multi_reduction <minsi>, %34, %cst_9 [1] : vector<8x128xi32> to vector<8xi32>
    %36 = vector.shape_cast %35 : vector<8xi32> to vector<8x1xi32>
    %37 = vector.broadcast %36 : vector<8x1xi32> to vector<8x128xi32>
    %38 = arith.cmpi eq, %22, %37 : vector<8x128xi32>
    %39 = arith.extui %38 : vector<8x128xi1> to vector<8x128xi32>
    %40 = arith.sitofp %39 : vector<8x128xi32> to vector<8x128xf32>
    %cst_10 = arith.constant 5.000000e-01 : f32
    %41 = vector.broadcast %cst_10 : f32 to vector<8x128xf32>
    %42 = arith.mulf %41, %27 : vector<8x128xf32>
    %cst_11 = arith.constant 5.000000e-01 : f32
    %43 = vector.broadcast %cst_11 : f32 to vector<8x128xf32>
    %44 = arith.mulf %43, %40 : vector<8x128xf32>
    %45 = arith.addf %42, %44 : vector<8x128xf32>
    %46 = arith.mulf %45, %21 : vector<8x128xf32>
    %cst_12 = arith.constant dense<0.000000e+00> : vector<8xf32>
    %47 = vector.multi_reduction <add>, %46, %cst_12 [1] : vector<8x128xf32> to vector<8xf32>
    %48 = vector.shape_cast %47 : vector<8xf32> to vector<8x1xf32>
    %c0_13 = arith.constant 0 : index
    %c0_14 = arith.constant 0 : index
    %49 = vector.load %arg5[%c0_13, %c0_14] : memref<1x1xf32, #tpu.memory_space<vmem>>, vector<1x1xf32>
    %50 = arith.mulf %48, %11 : vector<8x1xf32>
    %cst_15 = arith.constant dense<0.000000e+00> : vector<1xf32>
    %51 = vector.multi_reduction <add>, %50, %cst_15 [0] : vector<8x1xf32> to vector<1xf32>
    %52 = vector.shape_cast %51 : vector<1xf32> to vector<1x1xf32>
    %53 = arith.addf %49, %52 : vector<1x1xf32>
    %c0_16 = arith.constant 0 : index
    %c0_17 = arith.constant 0 : index
    %54 = vector.load %arg5[%c0_16, %c0_17] : memref<1x1xf32, #tpu.memory_space<vmem>>, vector<1x1xf32>
    tpu.vector_store %arg5[%c0_16, %c0_17], %53 {strides = array<i32>} : memref<1x1xf32, #tpu.memory_space<vmem>>, vector<1x1xf32>,
    %c0_i32_18 = arith.constant 0 : i32
    %55 = arith.cmpi eq, %arg0, %c0_i32_18 : i32
    %56 = arith.extui %55 : i1 to i32
    %c0_i32_19 = arith.constant 0 : i32
    %57 = arith.cmpi ne, %56, %c0_i32_19 : i32
    scf.if %57 {
      %c0_20 = arith.constant 0 : index
      %c0_21 = arith.constant 0 : index
      %58 = vector.load %arg5[%c0_20, %c0_21] : memref<1x1xf32, #tpu.memory_space<vmem>>, vector<1x1xf32>
      %cst_22 = arith.constant -1.250000e-01 : f32
      %59 = vector.broadcast %cst_22 : f32 to vector<1x1xf32>
      %60 = arith.mulf %58, %59 : vector<1x1xf32>
      %c0_23 = arith.constant 0 : index
      %c0_24 = arith.constant 0 : index
      %61 = vector.load %arg4[%c0_23, %c0_24] : memref<1x1xf32, #tpu.memory_space<vmem>>, vector<1x1xf32>
      tpu.vector_store %arg4[%c0_23, %c0_24], %60 {strides = array<i32>} : memref<1x1xf32, #tpu.memory_space<vmem>>, vector<1x1xf32>,
    } else {
    }
    return
  }
  func.func @transform_0(%arg0: i32) -> (i32, i32) {
    %c0_i32 = arith.constant 0 : i32
    %c0_i32_0 = arith.constant 0 : i32
    return %arg0, %c0_i32 : i32, i32
  }
  func.func @transform_1(%arg0: i32) -> (i32, i32) {
    %c0_i32 = arith.constant 0 : i32
    %c0_i32_0 = arith.constant 0 : i32
    return %arg0, %c0_i32 : i32, i32
  }
  func.func @transform_2(%arg0: i32) -> (i32, i32) {
    %c0_i32 = arith.constant 0 : i32
    %c0_i32_0 = arith.constant 0 : i32
    return %arg0, %c0_i32 : i32, i32
  }
  func.func @transform_3(%arg0: i32) -> (i32, i32) {
    %c0_i32 = arith.constant 0 : i32
    %c0_i32_0 = arith.constant 0 : i32
    %c0_i32_1 = arith.constant 0 : i32
    return %c0_i32, %c0_i32_0 : i32, i32
  }
}

</mosaic_0001>

<llo_original>
// kernel: tpu_custom_call.1
$region0: #{tpu_custom_call.1}
  #allocation0 [shape = 'u32[]', space=smem, size = 0x4, offset = 0x4, fixed_abs, tag = 'smem constant byte address 0x4 - core index']
  #allocation1 [shape = 'u32[72,128]{1,0:T(1,128)}', space=vmem, size = 0x9000, scoped, tag = 'internal scratch']
  #allocation2 [shape = 'f32[1,1]{1,0:T(1,128)}', space=vmem, size = 0x200, scoped, tag = 'scratch operand']
  #allocation3 [shape = 'f32[1,1]{1,0:T(1,128)}', space=vmem, size = 0x200, scoped, tag = 'scratch operand']
  %s0 = inlined_call_operand.vmem [shape: f32[8,128], index: 0, kind: input, shape index: {}]
  %s1 = inlined_call_operand.vmem [shape: s32[8,1], index: 1, kind: input, shape index: {}]
  %s2 = inlined_call_operand.hbm [shape: f32[8,128], index: 2, kind: input, shape index: {}]
  %s3 = inlined_call_operand.hbm [shape: f32[1,1], index: 3, kind: output, shape index: {}]
  %s4 = sld [smem:[#allocation0]]
  $region34: #{tpu_custom_call.1} parent=0
    _
  %s6 = ssub.s32 1, %s4
  %s7 = scalar_select 0, %s6, %s4
  $region1: #{tpu_custom_call.1} parent=0
    #allocation4 [shape = 'u8[4096]{0}', space=vmem, size = 0x1000, scoped, tag = 'input window, operand 2, single buffered']
    #allocation5 [shape = 's32[1]{0}', space=sflag, size = 0x4, scoped, tag = 'scoped memory for tpu_custom_call.1']
    #allocation6 [shape = 's32[1]{0}', space=sflag, size = 0x4, scoped, tag = 'scoped memory for tpu_custom_call.1']
    #allocation7 [shape = 'u8[512]{0}', space=vmem, size = 0x400, scoped, tag = 'output window, operand 0, single buffered']
    %8 = vsyncpa [#allocation5], 0
    %9 = vsyncpa [#allocation6], 0
    // Predicated region
    $region2: #{tpu_custom_call.1} parent=1 // pred_check
      _
    $region3: #{tpu_custom_call.1} parent=1 // pred_check_branch
      %11 = sbr.rel (0) target = $region5
    $region4: #{tpu_custom_call.1} parent=1 // pred_region
      _
    $region5: #{tpu_custom_call.1} parent=1 // pred_fallthru
      _
    // Predicated region
    $region6: #{tpu_custom_call.1} parent=1 // pred_check
      _
    $region7: #{tpu_custom_call.1} parent=1 // pred_check_branch
      %13 = sbr.rel (0) target = $region9
    $region8: #{tpu_custom_call.1} parent=1 // pred_region
      _
    $region9: #{tpu_custom_call.1} parent=1 // pred_fallthru
      _
    // Predicated region
    $region10: #{tpu_custom_call.1} parent=1 // pred_check
      _
    $region11: #{tpu_custom_call.1} parent=1 // pred_check_branch
      %15 = sbr.rel (0) target = $region13
    $region12: #{tpu_custom_call.1} parent=1 // pred_region
      %17 = vsyncadd [#allocation5], 0
      %s19 = sshll.u32 %s2, 4
      %s20 = int_to_ptr.hbm [resolvable:$true] %s19
      %s21 = sshll.u32 [#allocation4], 4
      %s22 = int_to_ptr.vmem [resolvable:$true] %s21
      %24 = dma.hbm_to_vmem [thread:$0]  %s20, 128, %s22, [#allocation5]
    $region13: #{tpu_custom_call.1} parent=1 // pred_fallthru
      _
    // Predicated region
    $region14: #{tpu_custom_call.1} parent=1 // pred_check
      _
    $region15: #{tpu_custom_call.1} parent=1 // pred_check_branch
      %26 = sbr.rel (0) target = $region17
    $region16: #{tpu_custom_call.1} parent=1 // pred_region
      %28 = dma.done [#allocation5], 128
    $region17: #{tpu_custom_call.1} parent=1 // pred_fallthru
      _
    %p29 = scmp.eq.s32.totalorder 0, 0
    // Predicated region
    $region18: #{tpu_custom_call.1} parent=1 // pred_check
      %p30 = pneg %p29
    $region19: #{tpu_custom_call.1} parent=1 // pred_check_branch
      %32 = sbr.rel (%p30) target = $region21
    $region20: #{tpu_custom_call.1} parent=1 // pred_region
      %vm33 = vcmask 0
      %34 = vst.msk [vmem:[#allocation2] sm:$0x1] %vm33, 0.0
      %35 = vst.msk [vmem:[#allocation3] sm:$0x1] %vm33, 0.0
    $region21: #{tpu_custom_call.1} parent=1 // pred_fallthru
      _
    %v36 = vld [vmem:[%s0] sm:$0xff]
    %v37 = vlaneseq
    %v38 = vshrl.u32 %v37, 7
    %s39 = smul.u32 0, 8
    %v40 = vstv %s39
    %v41 = vadd.s32 %v38, %v40
    %vm42 = vcmp.lt.s32.totalorder %v41, 8
    %v43 = vsel %vm42, 1, 0
    %v44 = vcvt.s32.f32 %v43
    %45 = vmax.xlane.f32.xlu0 %v36
    %v46 = vpop.xlane.xlu0 %45
    %v47 = vsub.f32 %v36, %v46
    %v48 = vmul.f32 %v47, 1.442695
    %v49 = vpow.pop %v48
    %50 = vadd.xlane.f32.xlu0 %v49
    %v51 = vpop.xlane.xlu0 %50
    %v52 = vlog2.pop %v51
    %v53 = vmul.f32 %v52, 0.6931472
    %v54 = vsub.f32 %v47, %v53
    %v55 = vlaneseq
    %v56 = vand.u32 %v55, 127
    %v57 = vld [vmem:[%s1] sm:$0xff]
    %58 = vset.pattern.permute.xlu0 0
    %59 = vperm.xlu0 %58, %v57
    %v60 = vpop.permute.xlu0 %59
    %vm61 = vcmp.eq.s32.totalorder %v56, %v60
    %v62 = vsel %vm61, 1, 0
    %v63 = vcvt.s32.f32 %v62
    %v64 = vld [vmem:[#allocation4] sm:$0xff]
    %65 = vmax.xlane.f32.xlu0 %v64
    %v66 = vpop.xlane.xlu0 %65
    %vm67 = vcmp.eq.f32.partialorder %v64, %v66
    %v68 = vsel %vm67, %v56, 128
    %v69 = vand.u32 %v68, 65535
    %v70 = vshra.s32 %v68, 16
    %v71 = vcvt.s32.f32 %v69
    %v72 = vcvt.s32.f32 %v70
    %73 = vmin.xlane.f32.xlu0 %v72
    %v74 = vpop.xlane.xlu0 %73
    %vm75 = vcmp.eq.f32.partialorder %v72, %v74
    %v76 = vsel %vm75, %v71, inf
    %77 = vmin.xlane.f32.xlu0 %v76
    %v78 = vpop.xlane.xlu0 %77
    %v79 = vcvt.f32.s32 %v78
    %v80 = vcvt.f32.s32 %v74
    %v81 = vshll.u32 %v80, 16
    %v82 = vadd.s32 %v81, %v79
    %vm83 = vcmp.eq.s32.totalorder %v56, %v82
    %v84 = vsel %vm83, 1, 0
    %v85 = vcvt.s32.f32 %v84
    %v86 = vmul.f32 %v63, 0.5
    %v87 = vmul.f32 %v85, 0.5
    %v88 = vadd.f32 %v86, %v87
    %v89 = vmul.f32 %v88, %v54
    %90 = vadd.xlane.f32.xlu0 %v89
    %v91 = vpop.xlane.xlu0 %90
    %v92 = vld [vmem:[#allocation2] sm:$0x1]
    %v93 = vmul.f32 %v91, %v44
    %v94 = vrot.slane %v93, 4
    %v95 = vadd.f32 %v93, %v94
    %v96 = vrot.slane %v95, 2
    %v97 = vadd.f32 %v95, %v96
    %v98 = vrot.slane %v97, 1
    %v99 = vadd.f32 %v97, %v98
    %v100 = vadd.f32 %v92, %v99
    %vm101 = vcmask 0
    %102 = vst.msk [vmem:[#allocation2] sm:$0x1] %vm101, %v100
    // Predicated region
    $region22: #{tpu_custom_call.1} parent=1 // pred_check
      %p103 = pneg %p29
    $region23: #{tpu_custom_call.1} parent=1 // pred_check_branch
      %105 = sbr.rel (%p103) target = $region25
    $region24: #{tpu_custom_call.1} parent=1 // pred_region
      %v106 = vld [vmem:[#allocation2] sm:$0x1]
      %v107 = vmul.f32 %v106, -0.125
      %108 = vst.msk [vmem:[#allocation7] sm:$0x1] %vm101, %v107
    $region25: #{tpu_custom_call.1} parent=1 // pred_fallthru
      _
    // Predicated region
    $region26: #{tpu_custom_call.1} parent=1 // pred_check
      _
    $region27: #{tpu_custom_call.1} parent=1 // pred_check_branch
      %110 = sbr.rel (0) target = $region29
    $region28: #{tpu_custom_call.1} parent=1 // pred_region
      %112 = vsyncadd [#allocation6], 0
      %s114 = sshll.u32 [#allocation7], 4
      %s115 = int_to_ptr.vmem [resolvable:$true] %s114
      %s116 = sshll.u32 %s3, 4
      %s117 = int_to_ptr.hbm [resolvable:$true] %s116
      %119 = dma.vmem_to_hbm [thread:$0]  %s115, 16, %s117, [#allocation6]
    $region29: #{tpu_custom_call.1} parent=1 // pred_fallthru
      _
    // Predicated region
    $region30: #{tpu_custom_call.1} parent=1 // pred_check
      _
    $region31: #{tpu_custom_call.1} parent=1 // pred_check_branch
      %121 = sbr.rel (0) target = $region33
    $region32: #{tpu_custom_call.1} parent=1 // pred_region
      %123 = dma.done [#allocation6], 16
    $region33: #{tpu_custom_call.1} parent=1 // pred_fallthru
      _
    %124 = vsyncpa [#allocation5], 1
    %125 = vsyncpa [#allocation6], 1

</llo_original>
